<compile_context>
chip_gen: v7x
topology: tpu7x:2x2x1
jax: 0.10.0
libtpu: 0.0.40
codegen_flags: <defaults>
</compile_context>

<pallas_src>
import functools

import jax
import jax.numpy as jnp
from jax.experimental import pallas as pl
from jax.experimental.pallas import tpu as pltpu


def _shift_left(v, s):
    """shifted[..., i] = v[..., i + s]; values wrapped from the front only ever
    land on lanes that are never selected downstream (don't-care)."""
    return jnp.concatenate([v[..., s:], v[..., :s]], axis=-1)


def _zero_padding_max_pool_kernel(x_ref, o_ref, *, in_channels):
    # x_ref: (NB, C_in, Ho_blk, 2*W)  -- lane axis holds [row 2h | row 2h+1]
    # o_ref: (NB, C_out, Ho_blk, Wo)
    nb, c_out, ho, wo = o_ref.shape
    w = x_ref.shape[-1] // 2

    # ---- H-direction pool: two contiguous lane halves + elementwise max ----
    # (If w % 128 != 0 the second slice costs a lane rotate per tile; still
    #  O(elements) XLU work and avoids any wrapper-side HBM padding copy.)
    top = x_ref[:, :, :, :w]          # x[..., 2h,   :]
    bot = x_ref[:, :, :, w:]          # x[..., 2h+1, :]
    rowmax = jnp.maximum(top, bot)    # (NB, C_in, Ho_blk, W)

    # ---- W-direction pool: max of adjacent columns, valid at even lanes ----
    # pairmax[..., 2q] == out[..., q]   (O(W): one shift + one max)
    pairmax = jnp.maximum(rowmax, _shift_left(rowmax, 1))

    # ---- even-lane compaction in ceil(log2(Wo)) shift+select steps ----------
    # Invariant after the step with shift `s`: lanes [k*4s, k*4s + 2s) hold
    # out[k*2s .. k*2s + 2s - 1]; once s >= Wo the first Wo lanes hold the
    # compacted result.  Every kept/selected lane only reads valid lanes, so
    # the result is exact for any dtype (float or int).
    lane = jax.lax.broadcasted_iota(jnp.int32, (1, 1, 1, w), 3)
    cur = pairmax
    s = 1
    while s < wo:
        keep = (lane & (4 * s - 1)) < s
        cur = jnp.where(keep, cur, _shift_left(cur, s))
        s *= 2
    pooled = cur[:, :, :, :wo]

    # ---- write: data channels once; zero only the padded channels ----------
    # TODO(synk): lane-dense packed output store (Ho*Wo on the lane axis) not
    # implemented; stores are per-row masked vst when Wo % 128 != 0.
    o_ref[:, :in_channels, :, :] = pooled
    if c_out > in_channels:
        o_ref[:, in_channels:, :, :] = jnp.zeros(
            (nb, c_out - in_channels, ho, wo), o_ref.dtype)


def _choose_blocks(n, h_out, per_row_bytes, itemsize, budget=4 << 20):
    """Pick (n_blk, ho_blk) block sizes for the (batch, H_out) grid.

    Scoring follows the tuning guidance: stay inside a ~4 MiB/step HBM-traffic
    budget (so 2x double-buffered in/out blocks + in-kernel temporaries stay
    well under the 32 MiB VMEM limit), prefer >=4 grid steps when there is
    enough total work (>=2 per v7x TensorCore, DMA/compute overlap on
    v5e/v6e), prefer batch-only splits (contiguous HBM tiles), then the
    largest block (amortises the ~0.35us fixed per-step overhead).
    """
    sub = {4: 8, 2: 16, 1: 32}.get(itemsize, 8)          # sublane alignment
    total = n * h_out * per_row_bytes
    # Never shrink a step below ~1 MiB of traffic just to manufacture steps.
    target_steps = max(1, min(4, total // (1 << 20)))

    best_key, best = None, (1, h_out)
    for n_blk in range(1, n + 1):
        if n % n_blk:
            continue
        for ho_blk in range(1, h_out + 1):
            if h_out % ho_blk:
                continue
            if ho_blk != h_out and ho_blk % sub:
                continue                                  # keep sublane dim aligned
            step_bytes = n_blk * ho_blk * per_row_bytes
            steps = (n // n_blk) * (h_out // ho_blk)
            fits = step_bytes <= budget
            key = (fits,
                   steps >= target_steps,
                   ho_blk == h_out,
                   step_bytes if fits else -step_bytes)
            if best_key is None or key > best_key:
                best_key, best = key, (n_blk, ho_blk)
    return best


def zero_padding_max_pool(x, out_channels: int, stride: int = 2):
    """Pallas equivalent of ZeroPaddingMaxPool(in_channels, out_channels, stride)."""
    n, c_in, h, w = x.shape
    pad = out_channels - c_in
    assert pad >= 0, "only out_channels >= in_channels supported"  # TODO(synk): channel crop (negative pad) not implemented
    assert stride == 2, "specialised to the module default stride=2"  # TODO(synk): general stride for kernel_size=2 not implemented
    assert h >= 2 and w >= 2

    h_out, w_out = h // 2, w // 2

    if h % 2:
        # TODO(synk): odd H forces an HBM crop copy; could be masked in-kernel instead.
        x = x[:, :, : 2 * h_out, :]
    # Fold each pair of pooled rows into the lane axis:
    # (N, C, 2*Ho, W) -> (N, C, Ho, 2*W).  Free for contiguous NCHW (pure
    # reshape, no slice).  Odd W needs no crop: the trailing column is simply
    # never selected inside the kernel.
    x_folded = x.reshape(n, c_in, h_out, 2 * w)

    itemsize = x.dtype.itemsize
    # HBM traffic per (batch item, output row): folded input row pair + output row.
    per_row_bytes = (c_in * 2 * w + out_channels * w_out) * itemsize
    n_blk, ho_blk = _choose_blocks(n, h_out, per_row_bytes, itemsize)
    step_bytes = n_blk * ho_blk * per_row_bytes
    grid = (n // n_blk, h_out // ho_blk)

    kernel = functools.partial(_zero_padding_max_pool_kernel, in_channels=c_in)

    log_steps = max(w_out - 1, 0).bit_length()           # ceil(log2(w_out))
    cost = pl.CostEstimate(
        flops=n * c_in * h_out * w * (2 + 2 * log_steps),
        transcendentals=0,
        bytes_accessed=n * h_out * per_row_bytes,
    )

    return pl.pallas_call(
        kernel,
        out_shape=jax.ShapeDtypeStruct((n, out_channels, h_out, w_out), x.dtype),
        grid=grid,
        in_specs=[
            pl.BlockSpec((n_blk, c_in, ho_blk, 2 * w), lambda i, j: (i, 0, j, 0)),
        ],
        out_specs=pl.BlockSpec(
            (n_blk, out_channels, ho_blk, w_out), lambda i, j: (i, 0, j, 0)
        ),
        compiler_params=pltpu.CompilerParams(
            dimension_semantics=("parallel", "parallel"),
            # 32 MiB scoped VMEM is safe on v5e/v6e/v7x and leaves headroom for
            # the double-buffered in/out blocks plus in-kernel temporaries;
            # only raised (capped at 64 MiB) if a single block is forced bigger.
            vmem_limit_bytes=min(64 << 20, max(32 << 20, 3 * step_bytes)),
        ),
        cost_estimate=cost,
    )(x_folded)


if __name__ == "__main__":
    # Module config (ZeroPaddingMaxPool has no learnable parameters).
    in_channels, out_channels, stride = 4, 8, 2

    key = jax.random.PRNGKey(0)
    x = jax.random.normal(key, (2, in_channels, 16, 16), dtype=jnp.float32)

    out = zero_padding_max_pool(x, out_channels=out_channels, stride=stride)
    out = jax.block_until_ready(out)

    # Pure-JAX reference of the PyTorch forward:
    # MaxPool2d(kernel_size=2, stride=2) + zero channel padding.
    pooled_ref = jax.lax.reduce_window(
        x, -jnp.inf, jax.lax.max,
        window_dimensions=(1, 1, 2, 2),
        window_strides=(1, 1, stride, stride),
        padding="VALID",
    )
    ref = jnp.pad(
        pooled_ref, ((0, 0), (0, out_channels - in_channels), (0, 0), (0, 0))
    )

    assert out.shape == ref.shape, (out.shape, ref.shape)
    assert out.dtype == ref.dtype, (out.dtype, ref.dtype)
    assert jnp.array_equal(out, ref), "mismatch vs reference"

    print("KERNEL_OK")
</pallas_src>

<mosaic_0001>
module attributes {stable_mosaic.version = 11 : i64} {
  func.func @_zero_padding_max_pool_kernel(%arg0: i32, %arg1: i32, %arg2: memref<2x4x8x32xf32, #tpu.memory_space<vmem>>, %arg3: memref<2x8x8x8xf32, #tpu.memory_space<vmem>>) attributes {dimension_semantics = [#tpu.dimension_semantics<parallel>, #tpu.dimension_semantics<parallel>], iteration_bounds = array<i64: 1, 1>, scalar_prefetch = 0 : i64, scratch_operands = 0 : i64, tpu.core_type = #tpu.core_type<tc>, window_params = [{transform_indices = @transform_0, window_bounds = array<i64: 2, 4, 8, 32>}, {transform_indices = @transform_1, window_bounds = array<i64: 2, 8, 8, 8>}]} {
    %c0 = arith.constant 0 : index
    %c0_0 = arith.constant 0 : index
    %c0_1 = arith.constant 0 : index
    %c0_2 = arith.constant 0 : index
    %0 = vector.load %arg2[%c0, %c0_0, %c0_1, %c0_2] : memref<2x4x8x32xf32, #tpu.memory_space<vmem>>, vector<2x4x8x16xf32>
    %c0_3 = arith.constant 0 : index
    %c0_4 = arith.constant 0 : index
    %c0_5 = arith.constant 0 : index
    %c16 = arith.constant 16 : index
    %1 = vector.load %arg2[%c0_3, %c0_4, %c0_5, %c16] : memref<2x4x8x32xf32, #tpu.memory_space<vmem>>, vector<2x4x8x16xf32>
    %2 = arith.maximumf %0, %1 : vector<2x4x8x16xf32>
    %3 = vector.extract_strided_slice %2 {offsets = [0, 0, 0, 1], sizes = [2, 4, 8, 15], strides = [1, 1, 1, 1]} : vector<2x4x8x16xf32> to vector<2x4x8x15xf32>
    %4 = vector.extract_strided_slice %2 {offsets = [0, 0, 0, 0], sizes = [2, 4, 8, 1], strides = [1, 1, 1, 1]} : vector<2x4x8x16xf32> to vector<2x4x8x1xf32>
    %5 = tpu.concatenate %3, %4 in 3 : vector<2x4x8x15xf32>, vector<2x4x8x1xf32> -> vector<2x4x8x16xf32>
    %6 = arith.maximumf %2, %5 : vector<2x4x8x16xf32>
    %7 = tpu.iota {dimensions = array<i32: 3>} : vector<1x1x1x16xi32>
    %c3_i32 = arith.constant 3 : i32
    %8 = vector.broadcast %c3_i32 : i32 to vector<1x1x1x16xi32>
    %9 = arith.andi %7, %8 : vector<1x1x1x16xi32>
    %c1_i32 = arith.constant 1 : i32
    %10 = vector.broadcast %c1_i32 : i32 to vector<1x1x1x16xi32>
    %11 = arith.cmpi slt, %9, %10 : vector<1x1x1x16xi32>
    %12 = vector.extract_strided_slice %6 {offsets = [0, 0, 0, 1], sizes = [2, 4, 8, 15], strides = [1, 1, 1, 1]} : vector<2x4x8x16xf32> to vector<2x4x8x15xf32>
    %13 = vector.extract_strided_slice %6 {offsets = [0, 0, 0, 0], sizes = [2, 4, 8, 1], strides = [1, 1, 1, 1]} : vector<2x4x8x16xf32> to vector<2x4x8x1xf32>
    %14 = tpu.concatenate %12, %13 in 3 : vector<2x4x8x15xf32>, vector<2x4x8x1xf32> -> vector<2x4x8x16xf32>
    %15 = vector.shape_cast %11 : vector<1x1x1x16xi1> to vector<1x1x1x16xi1>
    %16 = vector.broadcast %15 : vector<1x1x1x16xi1> to vector<2x4x8x16xi1>
    %17 = arith.select %16, %6, %14 : vector<2x4x8x16xi1>, vector<2x4x8x16xf32>
    %c7_i32 = arith.constant 7 : i32
    %18 = vector.broadcast %c7_i32 : i32 to vector<1x1x1x16xi32>
    %19 = arith.andi %7, %18 : vector<1x1x1x16xi32>
    %c2_i32 = arith.constant 2 : i32
    %20 = vector.broadcast %c2_i32 : i32 to vector<1x1x1x16xi32>
    %21 = arith.cmpi slt, %19, %20 : vector<1x1x1x16xi32>
    %22 = vector.extract_strided_slice %17 {offsets = [0, 0, 0, 2], sizes = [2, 4, 8, 14], strides = [1, 1, 1, 1]} : vector<2x4x8x16xf32> to vector<2x4x8x14xf32>
    %23 = vector.extract_strided_slice %17 {offsets = [0, 0, 0, 0], sizes = [2, 4, 8, 2], strides = [1, 1, 1, 1]} : vector<2x4x8x16xf32> to vector<2x4x8x2xf32>
    %24 = tpu.concatenate %22, %23 in 3 : vector<2x4x8x14xf32>, vector<2x4x8x2xf32> -> vector<2x4x8x16xf32>
    %25 = vector.shape_cast %21 : vector<1x1x1x16xi1> to vector<1x1x1x16xi1>
    %26 = vector.broadcast %25 : vector<1x1x1x16xi1> to vector<2x4x8x16xi1>
    %27 = arith.select %26, %17, %24 : vector<2x4x8x16xi1>, vector<2x4x8x16xf32>
    %c15_i32 = arith.constant 15 : i32
    %28 = vector.broadcast %c15_i32 : i32 to vector<1x1x1x16xi32>
    %29 = arith.andi %7, %28 : vector<1x1x1x16xi32>
    %c4_i32 = arith.constant 4 : i32
    %30 = vector.broadcast %c4_i32 : i32 to vector<1x1x1x16xi32>
    %31 = arith.cmpi slt, %29, %30 : vector<1x1x1x16xi32>
    %32 = vector.extract_strided_slice %27 {offsets = [0, 0, 0, 4], sizes = [2, 4, 8, 12], strides = [1, 1, 1, 1]} : vector<2x4x8x16xf32> to vector<2x4x8x12xf32>
    %33 = vector.extract_strided_slice %27 {offsets = [0, 0, 0, 0], sizes = [2, 4, 8, 4], strides = [1, 1, 1, 1]} : vector<2x4x8x16xf32> to vector<2x4x8x4xf32>
    %34 = tpu.concatenate %32, %33 in 3 : vector<2x4x8x12xf32>, vector<2x4x8x4xf32> -> vector<2x4x8x16xf32>
    %35 = vector.shape_cast %31 : vector<1x1x1x16xi1> to vector<1x1x1x16xi1>
    %36 = vector.broadcast %35 : vector<1x1x1x16xi1> to vector<2x4x8x16xi1>
    %37 = arith.select %36, %27, %34 : vector<2x4x8x16xi1>, vector<2x4x8x16xf32>
    %38 = vector.extract_strided_slice %37 {offsets = [0, 0, 0, 0], sizes = [2, 4, 8, 8], strides = [1, 1, 1, 1]} : vector<2x4x8x16xf32> to vector<2x4x8x8xf32>
    %c0_6 = arith.constant 0 : index
    %c0_7 = arith.constant 0 : index
    %c0_8 = arith.constant 0 : index
    %c0_9 = arith.constant 0 : index
    %39 = vector.load %arg3[%c0_6, %c0_7, %c0_8, %c0_9] : memref<2x8x8x8xf32, #tpu.memory_space<vmem>>, vector<2x4x8x8xf32>
    tpu.vector_store %arg3[%c0_6, %c0_7, %c0_8, %c0_9], %38 {strides = array<i32>} : memref<2x8x8x8xf32, #tpu.memory_space<vmem>>, vector<2x4x8x8xf32>,
    %cst = arith.constant 0.000000e+00 : f32
    %40 = vector.broadcast %cst : f32 to vector<2x4x8x8xf32>
    %c0_10 = arith.constant 0 : index
    %c4 = arith.constant 4 : index
    %c0_11 = arith.constant 0 : index
    %c0_12 = arith.constant 0 : index
    %41 = vector.load %arg3[%c0_10, %c4, %c0_11, %c0_12] : memref<2x8x8x8xf32, #tpu.memory_space<vmem>>, vector<2x4x8x8xf32>
    tpu.vector_store %arg3[%c0_10, %c4, %c0_11, %c0_12], %40 {strides = array<i32>} : memref<2x8x8x8xf32, #tpu.memory_space<vmem>>, vector<2x4x8x8xf32>,
    return
  }
  func.func @transform_0(%arg0: i32, %arg1: i32) -> (i32, i32, i32, i32) {
    %c0_i32 = arith.constant 0 : i32
    %c0_i32_0 = arith.constant 0 : i32
    %c0_i32_1 = arith.constant 0 : i32
    return %arg0, %c0_i32, %arg1, %c0_i32_0 : i32, i32, i32, i32
  }
  func.func @transform_1(%arg0: i32, %arg1: i32) -> (i32, i32, i32, i32) {
    %c0_i32 = arith.constant 0 : i32
    %c0_i32_0 = arith.constant 0 : i32
    %c0_i32_1 = arith.constant 0 : i32
    return %arg0, %c0_i32, %arg1, %c0_i32_0 : i32, i32, i32, i32
  }
}

</mosaic_0001>

<llo_original>
// kernel: tpu_custom_call.1
$region0: #{tpu_custom_call.1}
  #allocation0 [shape = 'u32[]', space=smem, size = 0x4, offset = 0x4, fixed_abs, tag = 'smem constant byte address 0x4 - core index']
  #allocation1 [shape = 'u32[144,128]{1,0:T(1,128)}', space=vmem, size = 0x12000, scoped, tag = 'internal scratch']
  %s0 = inlined_call_operand.hbm [shape: f32[2,4,8,32], index: 0, kind: input, shape index: {}]
  %s1 = inlined_call_operand.hbm [shape: f32[2,8,8,8], index: 1, kind: output, shape index: {}]
  %s2 = sld [smem:[#allocation0]]
  $region18: #{tpu_custom_call.1} parent=0
    _
  %s4 = ssub.s32 1, %s2
  %s5 = scalar_select 0, %s4, %s2
  $region1: #{tpu_custom_call.1} parent=0
    #allocation2 [shape = 'u8[32768]{0}', space=vmem, size = 0x8000, scoped, tag = 'input window, operand 0, single buffered']
    #allocation3 [shape = 's32[1]{0}', space=sflag, size = 0x4, scoped, tag = 'scoped memory for tpu_custom_call.1']
    #allocation4 [shape = 's32[1]{0}', space=sflag, size = 0x4, scoped, tag = 'scoped memory for tpu_custom_call.1']
    #allocation5 [shape = 'u8[65536]{0}', space=vmem, size = 0x10000, scoped, tag = 'output window, operand 0, single buffered']
    %6 = vsyncpa [#allocation3], 0
    %7 = vsyncpa [#allocation4], 0
    // Predicated region
    $region2: #{tpu_custom_call.1} parent=1 // pred_check
      _
    $region3: #{tpu_custom_call.1} parent=1 // pred_check_branch
      %9 = sbr.rel (0) target = $region5
    $region4: #{tpu_custom_call.1} parent=1 // pred_region
      %s11 = ssub.s32 1024, 1024
      %12 = vsyncadd [#allocation3], %s11
      %s13 = sshll.u32 [#allocation2], 4
      %s14 = int_to_ptr.vmem [resolvable:$true] %s13
      %19 = dma.hbm_to_vmem [thread:$0]  %s0, 1024, %s14, [#allocation3], 128, 128, 8
    $region5: #{tpu_custom_call.1} parent=1 // pred_fallthru
      _
    // Predicated region
    $region6: #{tpu_custom_call.1} parent=1 // pred_check
      _
    $region7: #{tpu_custom_call.1} parent=1 // pred_check_branch
      %21 = sbr.rel (0) target = $region9
    $region8: #{tpu_custom_call.1} parent=1 // pred_region
      %22 = dma.done [#allocation3], 1024
    $region9: #{tpu_custom_call.1} parent=1 // pred_fallthru
      _
    %v23 = vld [vmem:[#allocation2] sm:$0xff]
    %v24 = vld [vmem:[#allocation2 + $0x8] sm:$0xff]
    %v25 = vld [vmem:[#allocation2 + $0x10] sm:$0xff]
    %v26 = vld [vmem:[#allocation2 + $0x18] sm:$0xff]
    %v27 = vld [vmem:[#allocation2 + $0x20] sm:$0xff]
    %v28 = vld [vmem:[#allocation2 + $0x28] sm:$0xff]
    %v29 = vld [vmem:[#allocation2 + $0x30] sm:$0xff]
    %v30 = vld [vmem:[#allocation2 + $0x38] sm:$0xff]
    %39 = vrot.lane.b32.xlu0 %v23, 112
    %v40 = vpop.permute.xlu0 %39
    %41 = vrot.lane.b32.xlu0 %v24, 112
    %v42 = vpop.permute.xlu0 %41
    %43 = vrot.lane.b32.xlu0 %v25, 112
    %v44 = vpop.permute.xlu0 %43
    %45 = vrot.lane.b32.xlu0 %v26, 112
    %v46 = vpop.permute.xlu0 %45
    %47 = vrot.lane.b32.xlu0 %v27, 112
    %v48 = vpop.permute.xlu0 %47
    %49 = vrot.lane.b32.xlu0 %v28, 112
    %v50 = vpop.permute.xlu0 %49
    %51 = vrot.lane.b32.xlu0 %v29, 112
    %v52 = vpop.permute.xlu0 %51
    %53 = vrot.lane.b32.xlu0 %v30, 112
    %v54 = vpop.permute.xlu0 %53
    %v63 = vmax.f32 %v23, %v40
    %v64 = vmax.f32 %v24, %v42
    %v65 = vmax.f32 %v25, %v44
    %v66 = vmax.f32 %v26, %v46
    %v67 = vmax.f32 %v27, %v48
    %v68 = vmax.f32 %v28, %v50
    %v69 = vmax.f32 %v29, %v52
    %v70 = vmax.f32 %v30, %v54
    %79 = vrot.lane.b32.xlu0 %v63, 127
    %v80 = vpop.permute.xlu0 %79
    %81 = vrot.lane.b32.xlu0 %v64, 127
    %v82 = vpop.permute.xlu0 %81
    %83 = vrot.lane.b32.xlu0 %v65, 127
    %v84 = vpop.permute.xlu0 %83
    %85 = vrot.lane.b32.xlu0 %v66, 127
    %v86 = vpop.permute.xlu0 %85
    %87 = vrot.lane.b32.xlu0 %v67, 127
    %v88 = vpop.permute.xlu0 %87
    %89 = vrot.lane.b32.xlu0 %v68, 127
    %v90 = vpop.permute.xlu0 %89
    %91 = vrot.lane.b32.xlu0 %v69, 127
    %v92 = vpop.permute.xlu0 %91
    %93 = vrot.lane.b32.xlu0 %v70, 127
    %v94 = vpop.permute.xlu0 %93
    %103 = vrot.lane.b32.xlu0 %v63, 15
    %v104 = vpop.permute.xlu0 %103
    %105 = vrot.lane.b32.xlu0 %v64, 15
    %v106 = vpop.permute.xlu0 %105
    %107 = vrot.lane.b32.xlu0 %v65, 15
    %v108 = vpop.permute.xlu0 %107
    %109 = vrot.lane.b32.xlu0 %v66, 15
    %v110 = vpop.permute.xlu0 %109
    %111 = vrot.lane.b32.xlu0 %v67, 15
    %v112 = vpop.permute.xlu0 %111
    %113 = vrot.lane.b32.xlu0 %v68, 15
    %v114 = vpop.permute.xlu0 %113
    %115 = vrot.lane.b32.xlu0 %v69, 15
    %v116 = vpop.permute.xlu0 %115
    %117 = vrot.lane.b32.xlu0 %v70, 15
    %v118 = vpop.permute.xlu0 %117
    %vm127 = vcmask 121856
    %v128 = vsel %vm127, %v80, %v104
    %v129 = vsel %vm127, %v82, %v106
    %v130 = vsel %vm127, %v84, %v108
    %v131 = vsel %vm127, %v86, %v110
    %v132 = vsel %vm127, %v88, %v112
    %v133 = vsel %vm127, %v90, %v114
    %v134 = vsel %vm127, %v92, %v116
    %v135 = vsel %vm127, %v94, %v118
    %v136 = vmax.f32 %v63, %v128
    %v137 = vmax.f32 %v64, %v129
    %v138 = vmax.f32 %v65, %v130
    %v139 = vmax.f32 %v66, %v131
    %v140 = vmax.f32 %v67, %v132
    %v141 = vmax.f32 %v68, %v133
    %v142 = vmax.f32 %v69, %v134
    %v143 = vmax.f32 %v70, %v135
    %v144 = vlaneseq
    %v145 = vand.u32 %v144, 127
    %v146 = vand.u32 %v145, 3
    %vm147 = vcmp.lt.s32.totalorder %v146, 1
    %156 = vrot.lane.b32.xlu0 %v136, 127
    %v157 = vpop.permute.xlu0 %156
    %158 = vrot.lane.b32.xlu0 %v137, 127
    %v159 = vpop.permute.xlu0 %158
    %160 = vrot.lane.b32.xlu0 %v138, 127
    %v161 = vpop.permute.xlu0 %160
    %162 = vrot.lane.b32.xlu0 %v139, 127
    %v163 = vpop.permute.xlu0 %162
    %164 = vrot.lane.b32.xlu0 %v140, 127
    %v165 = vpop.permute.xlu0 %164
    %166 = vrot.lane.b32.xlu0 %v141, 127
    %v167 = vpop.permute.xlu0 %166
    %168 = vrot.lane.b32.xlu0 %v142, 127
    %v169 = vpop.permute.xlu0 %168
    %170 = vrot.lane.b32.xlu0 %v143, 127
    %v171 = vpop.permute.xlu0 %170
    %180 = vrot.lane.b32.xlu0 %v136, 15
    %v181 = vpop.permute.xlu0 %180
    %182 = vrot.lane.b32.xlu0 %v137, 15
    %v183 = vpop.permute.xlu0 %182
    %184 = vrot.lane.b32.xlu0 %v138, 15
    %v185 = vpop.permute.xlu0 %184
    %186 = vrot.lane.b32.xlu0 %v139, 15
    %v187 = vpop.permute.xlu0 %186
    %188 = vrot.lane.b32.xlu0 %v140, 15
    %v189 = vpop.permute.xlu0 %188
    %190 = vrot.lane.b32.xlu0 %v141, 15
    %v191 = vpop.permute.xlu0 %190
    %192 = vrot.lane.b32.xlu0 %v142, 15
    %v193 = vpop.permute.xlu0 %192
    %194 = vrot.lane.b32.xlu0 %v143, 15
    %v195 = vpop.permute.xlu0 %194
    %v204 = vsel %vm127, %v157, %v181
    %v205 = vsel %vm127, %v159, %v183
    %v206 = vsel %vm127, %v161, %v185
    %v207 = vsel %vm127, %v163, %v187
    %v208 = vsel %vm127, %v165, %v189
    %v209 = vsel %vm127, %v167, %v191
    %v210 = vsel %vm127, %v169, %v193
    %v211 = vsel %vm127, %v171, %v195
    %v212 = vsel %vm147, 1, 0
    %vm213 = vcmp.eq.s32.totalorder %v212, 1
    %v214 = vsel %vm213, %v136, %v204
    %v215 = vsel %vm213, %v137, %v205
    %v216 = vsel %vm213, %v138, %v206
    %v217 = vsel %vm213, %v139, %v207
    %v218 = vsel %vm213, %v140, %v208
    %v219 = vsel %vm213, %v141, %v209
    %v220 = vsel %vm213, %v142, %v210
    %v221 = vsel %vm213, %v143, %v211
    %v222 = vand.u32 %v145, 7
    %vm223 = vcmp.lt.s32.totalorder %v222, 2
    %232 = vrot.lane.b32.xlu0 %v214, 126
    %v233 = vpop.permute.xlu0 %232
    %234 = vrot.lane.b32.xlu0 %v215, 126
    %v235 = vpop.permute.xlu0 %234
    %236 = vrot.lane.b32.xlu0 %v216, 126
    %v237 = vpop.permute.xlu0 %236
    %238 = vrot.lane.b32.xlu0 %v217, 126
    %v239 = vpop.permute.xlu0 %238
    %240 = vrot.lane.b32.xlu0 %v218, 126
    %v241 = vpop.permute.xlu0 %240
    %242 = vrot.lane.b32.xlu0 %v219, 126
    %v243 = vpop.permute.xlu0 %242
    %244 = vrot.lane.b32.xlu0 %v220, 126
    %v245 = vpop.permute.xlu0 %244
    %246 = vrot.lane.b32.xlu0 %v221, 126
    %v247 = vpop.permute.xlu0 %246
    %256 = vrot.lane.b32.xlu0 %v214, 14
    %v257 = vpop.permute.xlu0 %256
    %258 = vrot.lane.b32.xlu0 %v215, 14
    %v259 = vpop.permute.xlu0 %258
    %260 = vrot.lane.b32.xlu0 %v216, 14
    %v261 = vpop.permute.xlu0 %260
    %262 = vrot.lane.b32.xlu0 %v217, 14
    %v263 = vpop.permute.xlu0 %262
    %264 = vrot.lane.b32.xlu0 %v218, 14
    %v265 = vpop.permute.xlu0 %264
    %266 = vrot.lane.b32.xlu0 %v219, 14
    %v267 = vpop.permute.xlu0 %266
    %268 = vrot.lane.b32.xlu0 %v220, 14
    %v269 = vpop.permute.xlu0 %268
    %270 = vrot.lane.b32.xlu0 %v221, 14
    %v271 = vpop.permute.xlu0 %270
    %vm280 = vcmask 113664
    %v281 = vsel %vm280, %v233, %v257
    %v282 = vsel %vm280, %v235, %v259
    %v283 = vsel %vm280, %v237, %v261
    %v284 = vsel %vm280, %v239, %v263
    %v285 = vsel %vm280, %v241, %v265
    %v286 = vsel %vm280, %v243, %v267
    %v287 = vsel %vm280, %v245, %v269
    %v288 = vsel %vm280, %v247, %v271
    %v289 = vsel %vm223, 1, 0
    %vm290 = vcmp.eq.s32.totalorder %v289, 1
    %v291 = vsel %vm290, %v214, %v281
    %v292 = vsel %vm290, %v215, %v282
    %v293 = vsel %vm290, %v216, %v283
    %v294 = vsel %vm290, %v217, %v284
    %v295 = vsel %vm290, %v218, %v285
    %v296 = vsel %vm290, %v219, %v286
    %v297 = vsel %vm290, %v220, %v287
    %v298 = vsel %vm290, %v221, %v288
    %v299 = vand.u32 %v145, 15
    %vm300 = vcmp.lt.s32.totalorder %v299, 4
    %309 = vrot.lane.b32.xlu0 %v291, 124
    %v310 = vpop.permute.xlu0 %309
    %311 = vrot.lane.b32.xlu0 %v292, 124
    %v312 = vpop.permute.xlu0 %311
    %313 = vrot.lane.b32.xlu0 %v293, 124
    %v314 = vpop.permute.xlu0 %313
    %315 = vrot.lane.b32.xlu0 %v294, 124
    %v316 = vpop.permute.xlu0 %315
    %317 = vrot.lane.b32.xlu0 %v295, 124
    %v318 = vpop.permute.xlu0 %317
    %319 = vrot.lane.b32.xlu0 %v296, 124
    %v320 = vpop.permute.xlu0 %319
    %321 = vrot.lane.b32.xlu0 %v297, 124
    %v322 = vpop.permute.xlu0 %321
    %323 = vrot.lane.b32.xlu0 %v298, 124
    %v324 = vpop.permute.xlu0 %323
    %333 = vrot.lane.b32.xlu0 %v291, 12
    %v334 = vpop.permute.xlu0 %333
    %335 = vrot.lane.b32.xlu0 %v292, 12
    %v336 = vpop.permute.xlu0 %335
    %337 = vrot.lane.b32.xlu0 %v293, 12
    %v338 = vpop.permute.xlu0 %337
    %339 = vrot.lane.b32.xlu0 %v294, 12
    %v340 = vpop.permute.xlu0 %339
    %341 = vrot.lane.b32.xlu0 %v295, 12
    %v342 = vpop.permute.xlu0 %341
    %343 = vrot.lane.b32.xlu0 %v296, 12
    %v344 = vpop.permute.xlu0 %343
    %345 = vrot.lane.b32.xlu0 %v297, 12
    %v346 = vpop.permute.xlu0 %345
    %347 = vrot.lane.b32.xlu0 %v298, 12
    %v348 = vpop.permute.xlu0 %347
    %vm357 = vcmask 97280
    %v358 = vsel %vm357, %v310, %v334
    %v359 = vsel %vm357, %v312, %v336
    %v360 = vsel %vm357, %v314, %v338
    %v361 = vsel %vm357, %v316, %v340
    %v362 = vsel %vm357, %v318, %v342
    %v363 = vsel %vm357, %v320, %v344
    %v364 = vsel %vm357, %v322, %v346
    %v365 = vsel %vm357, %v324, %v348
    %v366 = vsel %vm300, 1, 0
    %vm367 = vcmp.eq.s32.totalorder %v366, 1
    %v368 = vsel %vm367, %v291, %v358
    %v369 = vsel %vm367, %v292, %v359
    %v370 = vsel %vm367, %v293, %v360
    %v371 = vsel %vm367, %v294, %v361
    %v372 = vsel %vm367, %v295, %v362
    %v373 = vsel %vm367, %v296, %v363
    %v374 = vsel %vm367, %v297, %v364
    %v375 = vsel %vm367, %v298, %v365
    %vm376 = vcmask 64512
    %377 = vst.msk [vmem:[#allocation5] sm:$0xff] %vm376, %v368
    %378 = vst.msk [vmem:[#allocation5 + $0x8] sm:$0xff] %vm376, %v369
    %379 = vst.msk [vmem:[#allocation5 + $0x10] sm:$0xff] %vm376, %v370
    %380 = vst.msk [vmem:[#allocation5 + $0x18] sm:$0xff] %vm376, %v371
    %381 = vst.msk [vmem:[#allocation5 + $0x40] sm:$0xff] %vm376, %v372
    %382 = vst.msk [vmem:[#allocation5 + $0x48] sm:$0xff] %vm376, %v373
    %383 = vst.msk [vmem:[#allocation5 + $0x50] sm:$0xff] %vm376, %v374
    %384 = vst.msk [vmem:[#allocation5 + $0x58] sm:$0xff] %vm376, %v375
    %s385 = scalar_lea.vmem [#allocation5], 32
    %386 = vst.msk [vmem:[%s385] sm:$0xff] %vm376, 0.0
    %387 = vst.msk [vmem:[%s385 + $0x8] sm:$0xff] %vm376, 0.0
    %388 = vst.msk [vmem:[%s385 + $0x10] sm:$0xff] %vm376, 0.0
    %389 = vst.msk [vmem:[%s385 + $0x18] sm:$0xff] %vm376, 0.0
    %390 = vst.msk [vmem:[%s385 + $0x40] sm:$0xff] %vm376, 0.0
    %391 = vst.msk [vmem:[%s385 + $0x48] sm:$0xff] %vm376, 0.0
    %392 = vst.msk [vmem:[%s385 + $0x50] sm:$0xff] %vm376, 0.0
    %393 = vst.msk [vmem:[%s385 + $0x58] sm:$0xff] %vm376, 0.0
    // Predicated region
    $region10: #{tpu_custom_call.1} parent=1 // pred_check
      _
    $region11: #{tpu_custom_call.1} parent=1 // pred_check_branch
      %395 = sbr.rel (0) target = $region13
    $region12: #{tpu_custom_call.1} parent=1 // pred_region
      %s397 = ssub.s32 2048, 2048
      %398 = vsyncadd [#allocation4], %s397
      %s399 = sshll.u32 [#allocation5], 4
      %s400 = int_to_ptr.vmem [resolvable:$true] %s399
      %405 = dma.vmem_to_hbm [thread:$0]  %s400, 2048, %s1, [#allocation4], 128, 128, 8
    $region13: #{tpu_custom_call.1} parent=1 // pred_fallthru
      _
    // Predicated region
    $region14: #{tpu_custom_call.1} parent=1 // pred_check
      _
    $region15: #{tpu_custom_call.1} parent=1 // pred_check_branch
      %407 = sbr.rel (0) target = $region17
    $region16: #{tpu_custom_call.1} parent=1 // pred_region
      %408 = dma.done [#allocation4], 2048
    $region17: #{tpu_custom_call.1} parent=1 // pred_fallthru
      _
    %409 = vsyncpa [#allocation3], 1
    %410 = vsyncpa [#allocation4], 1

</llo_original>
